<compile_context>
chip_gen: v5e
topology: v5e:2x2
jax: 0.10.0
libtpu: 0.0.40
codegen_flags: <defaults>
</compile_context>

<pallas_src>
import functools

import jax
import jax.numpy as jnp
from jax.experimental import pallas as pl
from jax.experimental.pallas import tpu as pltpu

HIDDEN = 64          # logical hidden width (matches the PyTorch module)
HIDDEN_PAD = 128     # lane-dense padded hidden width
LANE = 128


def _round_up(n, m):
    return ((n + m - 1) // m) * m


def dqn_kernel(x_ref, w1_ref, b1_ref, w2_ref, b2_ref, w3_ref, b3_ref, o_ref):
    # One (TILE_B, n_in) activation tile per grid step; all weights resident.
    x = x_ref[...]
    h1 = jnp.dot(x, w1_ref[...], preferred_element_type=jnp.float32) + b1_ref[...]
    h1 = jnp.maximum(h1, 0.0).astype(w2_ref.dtype)
    h2 = jnp.dot(h1, w2_ref[...], preferred_element_type=jnp.float32) + b2_ref[...]
    h2 = jnp.maximum(h2, 0.0).astype(w3_ref.dtype)
    # Output tile is lane-dense f32: plain unmasked store, no astype needed.
    o_ref[...] = jnp.dot(h2, w3_ref[...], preferred_element_type=jnp.float32) + b3_ref[...]


def init_params(key, n_inputs, n_outputs, hidden=HIDDEN):
    # Deterministic init mimicking PyTorch nn.Linear default:
    # U(-1/sqrt(fan_in), 1/sqrt(fan_in)) for both weights and biases.
    def linear_init(k, fan_in, fan_out):
        kw, kb = jax.random.split(k)
        bound = 1.0 / jnp.sqrt(jnp.float32(fan_in))
        w = jax.random.uniform(kw, (fan_in, fan_out), jnp.float32, -bound, bound)
        b = jax.random.uniform(kb, (1, fan_out), jnp.float32, -bound, bound)
        return w, b

    k1, k2, k3 = jax.random.split(key, 3)
    w1, b1 = linear_init(k1, n_inputs, hidden)
    w2, b2 = linear_init(k2, hidden, hidden)
    w3, b3 = linear_init(k3, hidden, n_outputs)
    return (w1, b1, w2, b2, w3, b3)


def _pad2(a, rows, cols):
    r, c = a.shape
    return jnp.pad(a, ((0, rows - r), (0, cols - c)))


def pad_params(params):
    """Zero-pad hidden dim to 128 and output dim to a multiple of 128.

    Zero padding is numerically exact for this MLP: padded hidden units are
    relu(0 + 0) = 0 everywhere, and padded output columns are sliced off.
    """
    w1, b1, w2, b2, w3, b3 = params
    n_in = w1.shape[0]
    n_out = w3.shape[1]
    out_pad = _round_up(max(n_out, LANE), LANE)
    w1p = _pad2(w1, n_in, HIDDEN_PAD)
    b1p = _pad2(b1, 1, HIDDEN_PAD)
    w2p = _pad2(w2, HIDDEN_PAD, HIDDEN_PAD)
    b2p = _pad2(b2, 1, HIDDEN_PAD)
    w3p = _pad2(w3, HIDDEN_PAD, out_pad)
    b3p = _pad2(b3, 1, out_pad)
    return (w1p, b1p, w2p, b2p, w3p, b3p)


@functools.partial(jax.jit, static_argnames=("n_outputs", "tile_b", "compute_dtype"))
def dqn_forward(x, padded_params, n_outputs, *, tile_b=512,
                compute_dtype=jnp.float32):
    """Batched DQN forward. x: (B, n_inputs) f32 -> (B, n_outputs) f32.

    Intended for large batches (vectorized envs / replay minibatches); for a
    per-env-step batch of 1-2 a plain fused-XLA forward is cheaper than any
    pallas_call launch, but the kernel is still exact there.
    """
    w1, b1, w2, b2, w3, b3 = padded_params
    n_in = w1.shape[0]
    out_pad = w3.shape[1]
    B = x.shape[0]

    # Effective batch tile: at most tile_b, at least a sublane-aligned cover of
    # the actual batch (so a batch of 2 pads to 8 rows, not 512).
    tile_b_eff = min(tile_b, _round_up(B, 8))
    b_pad = _round_up(B, tile_b_eff)
    grid = (pl.cdiv(b_pad, tile_b_eff),)

    # Optional bf16 compute (v6e/v7x): cast x + weights, keep f32 accumulate,
    # biases and output stay f32.  Default f32 (recommended on v5e).
    xc = x.astype(compute_dtype)
    w1c, w2c, w3c = (w.astype(compute_dtype) for w in (w1, w2, w3))
    x_pad = jnp.pad(xc, ((0, b_pad - B), (0, 0)))

    # Advisory cost hint for XLA scheduling around the custom call.
    itemsize = jnp.dtype(compute_dtype).itemsize
    flops = 2 * b_pad * (n_in * HIDDEN_PAD + HIDDEN_PAD * HIDDEN_PAD
                         + HIDDEN_PAD * out_pad)
    bytes_accessed = (b_pad * n_in * itemsize                       # x in
                      + b_pad * out_pad * 4                         # out
                      + (n_in * HIDDEN_PAD + HIDDEN_PAD * HIDDEN_PAD
                         + HIDDEN_PAD * out_pad) * itemsize         # weights
                      + (2 * HIDDEN_PAD + out_pad) * 4)             # biases

    const = lambda shape: pl.BlockSpec(shape, lambda i: (0, 0))
    out = pl.pallas_call(
        dqn_kernel,
        out_shape=jax.ShapeDtypeStruct((b_pad, out_pad), jnp.float32),
        grid=grid,
        in_specs=[
            pl.BlockSpec((tile_b_eff, n_in), lambda i: (i, 0)),   # x tile (streamed)
            const((n_in, HIDDEN_PAD)),                            # w1 (resident)
            const((1, HIDDEN_PAD)),                               # b1
            const((HIDDEN_PAD, HIDDEN_PAD)),                      # w2
            const((1, HIDDEN_PAD)),                               # b2
            const((HIDDEN_PAD, out_pad)),                         # w3
            const((1, out_pad)),                                  # b3
        ],
        out_specs=pl.BlockSpec((tile_b_eff, out_pad), lambda i: (i, 0)),
        compiler_params=pltpu.CompilerParams(
            dimension_semantics=("parallel",)),                   # dual-TC sharding on v7x
        cost_estimate=pl.CostEstimate(flops=flops, transcendentals=0,
                                      bytes_accessed=bytes_accessed),
    )(x_pad, w1c, b1, w2c, b2, w3c, b3)

    return out[:B, :n_outputs]


def dqn_forward_ref(x, params):
    w1, b1, w2, b2, w3, b3 = params
    h = jnp.maximum(x @ w1 + b1, 0.0)
    h = jnp.maximum(h @ w2 + b2, 0.0)
    return h @ w3 + b3


if __name__ == "__main__":
    key = jax.random.PRNGKey(0)
    n_inputs, n_outputs, batch = 8, 4, 2

    k_params, k_x, k_big = jax.random.split(key, 3)
    params = init_params(k_params, n_inputs, n_outputs)
    padded = pad_params(params)

    # Small (per-env-step sized) input — exercised for correctness.
    x = jax.random.normal(k_x, (batch, n_inputs), jnp.float32)
    out = dqn_forward(x, padded, n_outputs)
    jax.block_until_ready(out)
    ref = dqn_forward_ref(x, params)
    assert out.shape == (batch, n_outputs)
    assert jnp.allclose(out, ref, atol=1e-5, rtol=1e-5)

    # Minibatch-sized input exercising the batch grid (multiple tiles).
    xb = jax.random.normal(k_big, (1024, n_inputs), jnp.float32)
    outb = dqn_forward(xb, padded, n_outputs)
    jax.block_until_ready(outb)
    refb = dqn_forward_ref(xb, params)
    assert outb.shape == (1024, n_outputs)
    assert jnp.allclose(outb, refb, atol=1e-4, rtol=1e-4)

    print("KERNEL_OK")
</pallas_src>

<mosaic_0001>
module attributes {stable_mosaic.version = 11 : i64} {
  func.func @dqn_kernel(%arg0: i32, %arg1: memref<8x8xf32, #tpu.memory_space<vmem>>, %arg2: memref<8x128xf32, #tpu.memory_space<vmem>>, %arg3: memref<1x128xf32, #tpu.memory_space<vmem>>, %arg4: memref<128x128xf32, #tpu.memory_space<vmem>>, %arg5: memref<1x128xf32, #tpu.memory_space<vmem>>, %arg6: memref<128x128xf32, #tpu.memory_space<vmem>>, %arg7: memref<1x128xf32, #tpu.memory_space<vmem>>, %arg8: memref<8x128xf32, #tpu.memory_space<vmem>>) attributes {dimension_semantics = [#tpu.dimension_semantics<parallel>], iteration_bounds = array<i64: 1>, scalar_prefetch = 0 : i64, scratch_operands = 0 : i64, tpu.core_type = #tpu.core_type<tc>, window_params = [{transform_indices = @transform_0, window_bounds = array<i64: 8, 8>}, {pipeline_mode = #tpu.pipeline_mode<synchronous>, transform_indices = @transform_1, window_bounds = array<i64: 8, 128>}, {pipeline_mode = #tpu.pipeline_mode<synchronous>, transform_indices = @transform_2, window_bounds = array<i64: 1, 128>}, {pipeline_mode = #tpu.pipeline_mode<synchronous>, transform_indices = @transform_3, window_bounds = array<i64: 128, 128>}, {pipeline_mode = #tpu.pipeline_mode<synchronous>, transform_indices = @transform_4, window_bounds = array<i64: 1, 128>}, {pipeline_mode = #tpu.pipeline_mode<synchronous>, transform_indices = @transform_5, window_bounds = array<i64: 128, 128>}, {pipeline_mode = #tpu.pipeline_mode<synchronous>, transform_indices = @transform_6, window_bounds = array<i64: 1, 128>}, {transform_indices = @transform_7, window_bounds = array<i64: 8, 128>}]} {
    %c0 = arith.constant 0 : index
    %c0_0 = arith.constant 0 : index
    %0 = vector.load %arg1[%c0, %c0_0] : memref<8x8xf32, #tpu.memory_space<vmem>>, vector<8x8xf32>
    %c0_1 = arith.constant 0 : index
    %c0_2 = arith.constant 0 : index
    %1 = vector.load %arg2[%c0_1, %c0_2] : memref<8x128xf32, #tpu.memory_space<vmem>>, vector<8x128xf32>
    %cst = arith.constant dense<0.000000e+00> : vector<8x128xf32>
    %2 = tpu.matmul %0, %1, %cst {dimension_numbers = #tpu.dot_dimension_numbers<[1], [0], [0], [1], [0, 0, 1, 1], [], []>} : vector<8x8xf32>, vector<8x128xf32>, vector<8x128xf32> -> vector<8x128xf32>
    %c0_3 = arith.constant 0 : index
    %c0_4 = arith.constant 0 : index
    %3 = vector.load %arg3[%c0_3, %c0_4] : memref<1x128xf32, #tpu.memory_space<vmem>>, vector<1x128xf32>
    %4 = vector.broadcast %3 : vector<1x128xf32> to vector<8x128xf32>
    %5 = arith.addf %2, %4 : vector<8x128xf32>
    %cst_5 = arith.constant 0.000000e+00 : f32
    %6 = vector.broadcast %cst_5 : f32 to vector<8x128xf32>
    %7 = arith.maximumf %5, %6 : vector<8x128xf32>
    %c0_6 = arith.constant 0 : index
    %c0_7 = arith.constant 0 : index
    %8 = vector.load %arg4[%c0_6, %c0_7] : memref<128x128xf32, #tpu.memory_space<vmem>>, vector<128x128xf32>
    %cst_8 = arith.constant dense<0.000000e+00> : vector<8x128xf32>
    %9 = tpu.matmul %7, %8, %cst_8 {dimension_numbers = #tpu.dot_dimension_numbers<[1], [0], [0], [1], [0, 0, 1, 1], [], []>} : vector<8x128xf32>, vector<128x128xf32>, vector<8x128xf32> -> vector<8x128xf32>
    %c0_9 = arith.constant 0 : index
    %c0_10 = arith.constant 0 : index
    %10 = vector.load %arg5[%c0_9, %c0_10] : memref<1x128xf32, #tpu.memory_space<vmem>>, vector<1x128xf32>
    %11 = vector.broadcast %10 : vector<1x128xf32> to vector<8x128xf32>
    %12 = arith.addf %9, %11 : vector<8x128xf32>
    %cst_11 = arith.constant 0.000000e+00 : f32
    %13 = vector.broadcast %cst_11 : f32 to vector<8x128xf32>
    %14 = arith.maximumf %12, %13 : vector<8x128xf32>
    %c0_12 = arith.constant 0 : index
    %c0_13 = arith.constant 0 : index
    %15 = vector.load %arg6[%c0_12, %c0_13] : memref<128x128xf32, #tpu.memory_space<vmem>>, vector<128x128xf32>
    %cst_14 = arith.constant dense<0.000000e+00> : vector<8x128xf32>
    %16 = tpu.matmul %14, %15, %cst_14 {dimension_numbers = #tpu.dot_dimension_numbers<[1], [0], [0], [1], [0, 0, 1, 1], [], []>} : vector<8x128xf32>, vector<128x128xf32>, vector<8x128xf32> -> vector<8x128xf32>
    %c0_15 = arith.constant 0 : index
    %c0_16 = arith.constant 0 : index
    %17 = vector.load %arg7[%c0_15, %c0_16] : memref<1x128xf32, #tpu.memory_space<vmem>>, vector<1x128xf32>
    %18 = vector.broadcast %17 : vector<1x128xf32> to vector<8x128xf32>
    %19 = arith.addf %16, %18 : vector<8x128xf32>
    %c0_17 = arith.constant 0 : index
    %c0_18 = arith.constant 0 : index
    %20 = vector.load %arg8[%c0_17, %c0_18] : memref<8x128xf32, #tpu.memory_space<vmem>>, vector<8x128xf32>
    tpu.vector_store %arg8[%c0_17, %c0_18], %19 {strides = array<i32>} : memref<8x128xf32, #tpu.memory_space<vmem>>, vector<8x128xf32>,
    return
  }
  func.func @transform_0(%arg0: i32) -> (i32, i32) {
    %c0_i32 = arith.constant 0 : i32
    %c0_i32_0 = arith.constant 0 : i32
    return %arg0, %c0_i32 : i32, i32
  }
  func.func @transform_1(%arg0: i32) -> (i32, i32) {
    %c0_i32 = arith.constant 0 : i32
    %c0_i32_0 = arith.constant 0 : i32
    %c0_i32_1 = arith.constant 0 : i32
    return %c0_i32, %c0_i32_0 : i32, i32
  }
  func.func @transform_2(%arg0: i32) -> (i32, i32) {
    %c0_i32 = arith.constant 0 : i32
    %c0_i32_0 = arith.constant 0 : i32
    %c0_i32_1 = arith.constant 0 : i32
    return %c0_i32, %c0_i32_0 : i32, i32
  }
  func.func @transform_3(%arg0: i32) -> (i32, i32) {
    %c0_i32 = arith.constant 0 : i32
    %c0_i32_0 = arith.constant 0 : i32
    %c0_i32_1 = arith.constant 0 : i32
    return %c0_i32, %c0_i32_0 : i32, i32
  }
  func.func @transform_4(%arg0: i32) -> (i32, i32) {
    %c0_i32 = arith.constant 0 : i32
    %c0_i32_0 = arith.constant 0 : i32
    %c0_i32_1 = arith.constant 0 : i32
    return %c0_i32, %c0_i32_0 : i32, i32
  }
  func.func @transform_5(%arg0: i32) -> (i32, i32) {
    %c0_i32 = arith.constant 0 : i32
    %c0_i32_0 = arith.constant 0 : i32
    %c0_i32_1 = arith.constant 0 : i32
    return %c0_i32, %c0_i32_0 : i32, i32
  }
  func.func @transform_6(%arg0: i32) -> (i32, i32) {
    %c0_i32 = arith.constant 0 : i32
    %c0_i32_0 = arith.constant 0 : i32
    %c0_i32_1 = arith.constant 0 : i32
    return %c0_i32, %c0_i32_0 : i32, i32
  }
  func.func @transform_7(%arg0: i32) -> (i32, i32) {
    %c0_i32 = arith.constant 0 : i32
    %c0_i32_0 = arith.constant 0 : i32
    return %arg0, %c0_i32 : i32, i32
  }
}

</mosaic_0001>

<llo_original>
// kernel: dqn_forward.1
$region0: #{dqn_forward.1}
  #allocation0 [shape = 'u32[]', space=smem, size = 0x4, offset = 0x4, fixed_abs, tag = 'smem constant byte address 0x4 - core index']
  #allocation1 [shape = 'u32[72,128]{1,0:T(1,128)}', space=vmem, size = 0x9000, scoped, tag = 'internal scratch']
  %s0 = inlined_call_operand.vmem [shape: f32[8,8], index: 0, kind: input, shape index: {}]
  %s1 = inlined_call_operand.vmem [shape: f32[8,128], index: 1, kind: input, shape index: {}]
  %s2 = inlined_call_operand.vmem [shape: f32[1,128], index: 2, kind: input, shape index: {}]
  %s3 = inlined_call_operand.hbm [shape: f32[128,128], index: 3, kind: input, shape index: {}]
  %s4 = inlined_call_operand.vmem [shape: f32[1,128], index: 4, kind: input, shape index: {}]
  %s5 = inlined_call_operand.hbm [shape: f32[128,128], index: 5, kind: input, shape index: {}]
  %s6 = inlined_call_operand.vmem [shape: f32[1,128], index: 6, kind: input, shape index: {}]
  %s7 = inlined_call_operand.vmem [shape: f32[8,128], index: 7, kind: output, shape index: {}]
  %s8 = sld [smem:[#allocation0]]
  $region46: #{dqn_forward.1} parent=0
    _
  %s10 = ssub.s32 1, %s8
  %s11 = scalar_select 0, %s10, %s8
  $region1: #{dqn_forward.1} parent=0
    #allocation2 [shape = 'u8[65536]{0}', space=vmem, size = 0x10000, scoped, tag = 'input window, operand 3, single buffered']
    #allocation3 [shape = 's32[1]{0}', space=sflag, size = 0x4, scoped, tag = 'scoped memory for dqn_forward.1']
    #allocation4 [shape = 'u8[65536]{0}', space=vmem, size = 0x10000, scoped, tag = 'input window, operand 5, single buffered']
    #allocation5 [shape = 's32[1]{0}', space=sflag, size = 0x4, scoped, tag = 'scoped memory for dqn_forward.1']
    %12 = vsyncpa [#allocation3], 0
    %13 = vsyncpa [#allocation5], 0
    // Predicated region
    $region2: #{dqn_forward.1} parent=1 // pred_check
      _
    $region3: #{dqn_forward.1} parent=1 // pred_check_branch
      %15 = sbr.rel (0) target = $region5
    $region4: #{dqn_forward.1} parent=1 // pred_region
      _
    $region5: #{dqn_forward.1} parent=1 // pred_fallthru
      _
    // Predicated region
    $region6: #{dqn_forward.1} parent=1 // pred_check
      _
    $region7: #{dqn_forward.1} parent=1 // pred_check_branch
      %17 = sbr.rel (0) target = $region9
    $region8: #{dqn_forward.1} parent=1 // pred_region
      _
    $region9: #{dqn_forward.1} parent=1 // pred_fallthru
      _
    // Predicated region
    $region10: #{dqn_forward.1} parent=1 // pred_check
      _
    $region11: #{dqn_forward.1} parent=1 // pred_check_branch
      %19 = sbr.rel (0) target = $region13
    $region12: #{dqn_forward.1} parent=1 // pred_region
      _
    $region13: #{dqn_forward.1} parent=1 // pred_fallthru
      _
    // Predicated region
    $region14: #{dqn_forward.1} parent=1 // pred_check
      _
    $region15: #{dqn_forward.1} parent=1 // pred_check_branch
      %21 = sbr.rel (0) target = $region17
    $region16: #{dqn_forward.1} parent=1 // pred_region
      %23 = vsyncadd [#allocation3], 0
      %s24 = sshll.u32 %s3, 4
      %s25 = int_to_ptr.hbm [resolvable:$true] %s24
      %s26 = sshll.u32 [#allocation2], 4
      %s27 = int_to_ptr.vmem [resolvable:$true] %s26
      %32 = dma.hbm_to_vmem [thread:$0]  %s25, 2048, %s27, [#allocation3], 128, 128, 8
    $region17: #{dqn_forward.1} parent=1 // pred_fallthru
      _
    // Predicated region
    $region18: #{dqn_forward.1} parent=1 // pred_check
      _
    $region19: #{dqn_forward.1} parent=1 // pred_check_branch
      %34 = sbr.rel (0) target = $region21
    $region20: #{dqn_forward.1} parent=1 // pred_region
      _
    $region21: #{dqn_forward.1} parent=1 // pred_fallthru
      _
    // Predicated region
    $region22: #{dqn_forward.1} parent=1 // pred_check
      _
    $region23: #{dqn_forward.1} parent=1 // pred_check_branch
      %36 = sbr.rel (0) target = $region25
    $region24: #{dqn_forward.1} parent=1 // pred_region
      %38 = vsyncadd [#allocation5], 0
      %s39 = sshll.u32 %s5, 4
      %s40 = int_to_ptr.hbm [resolvable:$true] %s39
      %s41 = sshll.u32 [#allocation4], 4
      %s42 = int_to_ptr.vmem [resolvable:$true] %s41
      %47 = dma.hbm_to_vmem [thread:$0]  %s40, 2048, %s42, [#allocation5], 128, 128, 8
    $region25: #{dqn_forward.1} parent=1 // pred_fallthru
      _
    // Predicated region
    $region26: #{dqn_forward.1} parent=1 // pred_check
      _
    $region27: #{dqn_forward.1} parent=1 // pred_check_branch
      %49 = sbr.rel (0) target = $region29
    $region28: #{dqn_forward.1} parent=1 // pred_region
      _
    $region29: #{dqn_forward.1} parent=1 // pred_fallthru
      _
    // Predicated region
    $region30: #{dqn_forward.1} parent=1 // pred_check
      _
    $region31: #{dqn_forward.1} parent=1 // pred_check_branch
      %51 = sbr.rel (0) target = $region33
    $region32: #{dqn_forward.1} parent=1 // pred_region
      %53 = dma.done [#allocation3], 2048
    $region33: #{dqn_forward.1} parent=1 // pred_fallthru
      _
    // Predicated region
    $region34: #{dqn_forward.1} parent=1 // pred_check
      _
    $region35: #{dqn_forward.1} parent=1 // pred_check_branch
      %55 = sbr.rel (0) target = $region37
    $region36: #{dqn_forward.1} parent=1 // pred_region
      %57 = dma.done [#allocation5], 2048
    $region37: #{dqn_forward.1} parent=1 // pred_fallthru
      _
    %v58 = vld [vmem:[%s0] sm:$0xff]
    %v59 = vld [vmem:[%s1] sm:$0xff]
    %v60 = vld [vmem:[%s2] sm:$0x1]
    %v62 = vperm.slane %v60, 0
    %vm64 = vcmask 64512
    %v66 = vsel %vm64, %v58, 0
    %68 = vmatpush.msra.mxu0 0.0
    %69 = vmatpush.msra.mxu0 0.0
    %70 = vmatpush.msra.mxu0 0.0
    %71 = vmatpush.msra.mxu0 0.0
    %72 = vmatpush.msra.mxu0 0.0
    %73 = vmatpush.msra.mxu0 0.0
    %74 = vmatpush.msra.mxu0 0.0
    %75 = vmatpush.msra.mxu0 0.0
    %76 = vmatpush.msra.mxu0 0.0
    %77 = vmatpush.msra.mxu0 0.0
    %78 = vmatpush.msra.mxu0 0.0
    %79 = vmatpush.msra.mxu0 0.0
    %80 = vmatpush.msra.mxu0 0.0
    %81 = vmatpush.msra.mxu0 0.0
    %82 = vmatpush.msra.mxu0 0.0
    %83 = vmatpush.msra.mxu0 %v59
    %84 = vmatmul.f32.gmra.mxu0 %v66
    %v85 = vpop.f32.mrf.mxu0
    %v86 = vadd.f32 %v62, %v85
    %87 = vdwg.mxu0
    %v88 = vmax.f32 %v86, 0.0
    %v89 = vld [vmem:[#allocation2] sm:$0xff]
    %v90 = vld [vmem:[#allocation2 + $0x8] sm:$0xff]
    %v91 = vld [vmem:[#allocation2 + $0x10] sm:$0xff]
    %v92 = vld [vmem:[#allocation2 + $0x18] sm:$0xff]
    %v93 = vld [vmem:[#allocation2 + $0x20] sm:$0xff]
    %v94 = vld [vmem:[#allocation2 + $0x28] sm:$0xff]
    %v95 = vld [vmem:[#allocation2 + $0x30] sm:$0xff]
    %v96 = vld [vmem:[#allocation2 + $0x38] sm:$0xff]
    %v97 = vld [vmem:[#allocation2 + $0x40] sm:$0xff]
    %v98 = vld [vmem:[#allocation2 + $0x48] sm:$0xff]
    %v99 = vld [vmem:[#allocation2 + $0x50] sm:$0xff]
    %v100 = vld [vmem:[#allocation2 + $0x58] sm:$0xff]
    %v101 = vld [vmem:[#allocation2 + $0x60] sm:$0xff]
    %v102 = vld [vmem:[#allocation2 + $0x68] sm:$0xff]
    %v103 = vld [vmem:[#allocation2 + $0x70] sm:$0xff]
    %v104 = vld [vmem:[#allocation2 + $0x78] sm:$0xff]
    %v105 = vld [vmem:[%s4] sm:$0x1]
    %v107 = vperm.slane %v105, 0
    %109 = vmatpush.msra.mxu0 %v104
    %110 = vmatpush.msra.mxu0 %v103
    %111 = vmatpush.msra.mxu0 %v102
    %112 = vmatpush.msra.mxu0 %v101
    %113 = vmatpush.msra.mxu0 %v100
    %114 = vmatpush.msra.mxu0 %v99
    %115 = vmatpush.msra.mxu0 %v98
    %116 = vmatpush.msra.mxu0 %v97
    %117 = vmatpush.msra.mxu0 %v96
    %118 = vmatpush.msra.mxu0 %v95
    %119 = vmatpush.msra.mxu0 %v94
    %120 = vmatpush.msra.mxu0 %v93
    %121 = vmatpush.msra.mxu0 %v92
    %122 = vmatpush.msra.mxu0 %v91
    %123 = vmatpush.msra.mxu0 %v90
    %124 = vmatpush.msra.mxu0 %v89
    %125 = vmatmul.f32.gmra.mxu0 %v88
    %v126 = vpop.f32.mrf.mxu0
    %v127 = vadd.f32 %v107, %v126
    %128 = vdwg.mxu0
    %v129 = vmax.f32 %v127, 0.0
    %v130 = vld [vmem:[#allocation4] sm:$0xff]
    %v131 = vld [vmem:[#allocation4 + $0x8] sm:$0xff]
    %v132 = vld [vmem:[#allocation4 + $0x10] sm:$0xff]
    %v133 = vld [vmem:[#allocation4 + $0x18] sm:$0xff]
    %v134 = vld [vmem:[#allocation4 + $0x20] sm:$0xff]
    %v135 = vld [vmem:[#allocation4 + $0x28] sm:$0xff]
    %v136 = vld [vmem:[#allocation4 + $0x30] sm:$0xff]
    %v137 = vld [vmem:[#allocation4 + $0x38] sm:$0xff]
    %v138 = vld [vmem:[#allocation4 + $0x40] sm:$0xff]
    %v139 = vld [vmem:[#allocation4 + $0x48] sm:$0xff]
    %v140 = vld [vmem:[#allocation4 + $0x50] sm:$0xff]
    %v141 = vld [vmem:[#allocation4 + $0x58] sm:$0xff]
    %v142 = vld [vmem:[#allocation4 + $0x60] sm:$0xff]
    %v143 = vld [vmem:[#allocation4 + $0x68] sm:$0xff]
    %v144 = vld [vmem:[#allocation4 + $0x70] sm:$0xff]
    %v145 = vld [vmem:[#allocation4 + $0x78] sm:$0xff]
    %v146 = vld [vmem:[%s6] sm:$0x1]
    %v148 = vperm.slane %v146, 0
    %150 = vmatpush.msra.mxu0 %v145
    %151 = vmatpush.msra.mxu0 %v144
    %152 = vmatpush.msra.mxu0 %v143
    %153 = vmatpush.msra.mxu0 %v142
    %154 = vmatpush.msra.mxu0 %v141
    %155 = vmatpush.msra.mxu0 %v140
    %156 = vmatpush.msra.mxu0 %v139
    %157 = vmatpush.msra.mxu0 %v138
    %158 = vmatpush.msra.mxu0 %v137
    %159 = vmatpush.msra.mxu0 %v136
    %160 = vmatpush.msra.mxu0 %v135
    %161 = vmatpush.msra.mxu0 %v134
    %162 = vmatpush.msra.mxu0 %v133
    %163 = vmatpush.msra.mxu0 %v132
    %164 = vmatpush.msra.mxu0 %v131
    %165 = vmatpush.msra.mxu0 %v130
    %166 = vmatmul.f32.gmra.mxu0 %v129
    %v167 = vpop.f32.mrf.mxu0
    %v168 = vadd.f32 %v148, %v167
    %169 = vdwg.mxu0
    %170 = vst [vmem:[%s7] sm:$0xff] %v168
    // Predicated region
    $region38: #{dqn_forward.1} parent=1 // pred_check
      _
    $region39: #{dqn_forward.1} parent=1 // pred_check_branch
      %172 = sbr.rel (0) target = $region41
    $region40: #{dqn_forward.1} parent=1 // pred_region
      _
    $region41: #{dqn_forward.1} parent=1 // pred_fallthru
      _
    // Predicated region
    $region42: #{dqn_forward.1} parent=1 // pred_check
      _
    $region43: #{dqn_forward.1} parent=1 // pred_check_branch
      %174 = sbr.rel (0) target = $region45
    $region44: #{dqn_forward.1} parent=1 // pred_region
      _
    $region45: #{dqn_forward.1} parent=1 // pred_fallthru
      _
    %175 = vsyncpa [#allocation3], 1
    %176 = vsyncpa [#allocation5], 1

</llo_original>
